<compile_context>
chip_gen: v7x
topology: tpu7x:2x2x1
jax: 0.10.0
libtpu: 0.0.40
codegen_flags: <defaults>
</compile_context>

<pallas_src>
import math

import jax
import jax.numpy as jnp
from jax.experimental import pallas as pl
from jax.experimental.pallas import tpu as pltpu


def _round_up(n, m):
    return ((n + m - 1) // m) * m


def _temporal_embed_kernel(idx_ref, table_ref, o_ref):
    # idx_ref  : (TR, F)          int32, indices already offset into fused table
    # table_ref: (V_pad, d_model) f32, fused (month|day|weekday|hour[|minute])
    # o_ref    : (TR, d_model)    out_dtype
    idx = idx_ref[...]                                   # (TR, F) int32
    n_feat = idx.shape[1]
    v_pad = table_ref.shape[0]

    # Multi-hot matrix: row t has a 1 at each of its F fused-table rows.
    # Vocab offsets are disjoint, so one matmul == exact sum of the F lookups.
    # Boolean ORs + a single cast at the end (saves n_feat full-width casts).
    iota_v = jax.lax.broadcasted_iota(jnp.int32, (1, v_pad), 1)
    hot = iota_v == idx[:, 0:1]
    for f in range(1, n_feat):                           # F is 4 or 5 (static)
        hot = hot | (iota_v == idx[:, f:f + 1])
    multi = hot.astype(jnp.float32)                      # (TR, v_pad)

    # HIGHEST precision: guarantees the f32 sinusoidal table is not silently
    # truncated to a single bf16 MXU pass (MXU has idle slack here anyway).
    o_ref[...] = jnp.dot(
        multi, table_ref[...],
        preferred_element_type=jnp.float32,
        precision=jax.lax.Precision.HIGHEST,
    ).astype(o_ref.dtype)


def _fixed_embedding_table(c_in, d_model):
    # FixedEmbedding: non-trainable sinusoidal table (c_in, d_model).
    position = jnp.arange(c_in, dtype=jnp.float32)[:, None]
    div_term = jnp.exp(jnp.arange(0, d_model, 2, dtype=jnp.float32)
                       * -(math.log(10000.0) / d_model))
    tab = jnp.zeros((c_in, d_model), dtype=jnp.float32)
    tab = tab.at[:, 0::2].set(jnp.sin(position * div_term))
    tab = tab.at[:, 1::2].set(jnp.cos(position * div_term))
    return tab


# Column order in the marks tensor (matches the torch forward):
#   x[:,:,0]=month  x[:,:,1]=day  x[:,:,2]=weekday  x[:,:,3]=hour  x[:,:,4]=minute
_VOCAB_SIZES = (13, 32, 7, 24, 4)


def make_temporal_embedding_params(d_model, freq='h'):
    """Precompute (hoisted out of the per-call path) the fused table and the
    per-feature row offsets into it."""
    n_feat = 5 if freq == 't' else 4
    sizes = _VOCAB_SIZES[:n_feat]
    tables = [_fixed_embedding_table(s, d_model) for s in sizes]

    offsets, off = [], 0
    for s in sizes:
        offsets.append(off)
        off += s
    v_total = off
    v_pad = max(128, _round_up(v_total, 128))   # lane-aligned MXU contraction dim

    fused = jnp.zeros((v_pad, d_model), dtype=jnp.float32)
    fused = fused.at[:v_total, :].set(jnp.concatenate(tables, axis=0))
    return fused, jnp.asarray(offsets, dtype=jnp.int32)


def _choose_row_tile(R, d_model, row_tile, out_itemsize):
    # Per-step VMEM footprint (bytes per tile row):
    #   2 * d_model * out_itemsize   double-buffered output block
    #   + d_model * 4                f32 matmul result
    #   + 3 * 128 * 4                lane-padded idx double-buffer + multi-hot
    bytes_per_row = 2 * d_model * out_itemsize + d_model * 4 + 3 * 128 * 4
    budget = 24 * 1024 * 1024                      # fits v7x 64 MiB with headroom
    tr_vmem = max(8, (budget // bytes_per_row) // 8 * 8)
    # Keep the parallel grid axis >= 2 steps so both v7x TensorCores get work.
    tr_split = _round_up(pl.cdiv(R, 2), 8) if R > 8 else 8
    tr = min(row_tile, tr_vmem, tr_split)
    return max(8, (tr // 8) * 8)


def temporal_embedding(x_mark, fused_table, offsets, d_model, *,
                       row_tile=2048, out_dtype=jnp.float32):
    """x_mark: (B, L, >=F) integer marks; returns (B, L, d_model) of out_dtype."""
    B, L, _ = x_mark.shape
    n_feat = int(offsets.shape[0])                       # 4 ('h') or 5 ('t')
    v_pad = fused_table.shape[0]
    out_itemsize = jnp.dtype(out_dtype).itemsize

    # Clamp each feature to its vocab (nn.Embedding would error on OOB; here an
    # OOB index must not silently read the next table), then offset into the
    # fused table's row space and flatten (B, L) -> rows.
    sizes = jnp.asarray(_VOCAB_SIZES[:n_feat], jnp.int32)
    idx = jnp.clip(x_mark[..., :n_feat].astype(jnp.int32), 0, sizes - 1)
    idx = idx + offsets[None, None, :]
    R = B * L
    idx_flat = idx.reshape(R, n_feat)

    TR = _choose_row_tile(R, d_model, row_tile, out_itemsize)
    grid = pl.cdiv(R, TR)                                # ragged last block is masked

    cost = pl.CostEstimate(
        flops=2 * R * v_pad * d_model,
        transcendentals=0,
        bytes_accessed=(4 * R * n_feat + 4 * v_pad * d_model
                        + out_itemsize * R * d_model),
    )

    out = pl.pallas_call(
        _temporal_embed_kernel,
        out_shape=jax.ShapeDtypeStruct((R, d_model), out_dtype),
        grid_spec=pltpu.PrefetchScalarGridSpec(
            num_scalar_prefetch=0,
            grid=(grid,),
            in_specs=[
                pl.BlockSpec((TR, n_feat), lambda i: (i, 0)),
                # Grid-invariant block index -> fused table stays resident in VMEM.
                pl.BlockSpec((v_pad, d_model), lambda i: (0, 0)),
            ],
            # Last dim equals the full d_model -> legal even when d_model % 128 != 0;
            # partial lanes / ragged last row block are masked on store.
            out_specs=pl.BlockSpec((TR, d_model), lambda i: (i, 0)),
        ),
        compiler_params=pltpu.CompilerParams(
            dimension_semantics=("parallel",),           # v7x: grid >= 2 -> both TCs
            vmem_limit_bytes=48 * 1024 * 1024,
        ),
        cost_estimate=cost,
    )(idx_flat, fused_table)

    return out.reshape(B, L, d_model)


def _reference(x_mark, d_model, freq='h'):
    # Pure-JAX reference matching the torch forward (embedding lookups + sum).
    n_feat = 5 if freq == 't' else 4
    out = jnp.zeros(x_mark.shape[:2] + (d_model,), jnp.float32)
    for col in range(n_feat):
        tab = _fixed_embedding_table(_VOCAB_SIZES[col], d_model)
        out = out + tab[x_mark[:, :, col].astype(jnp.int32)]
    return out


if __name__ == "__main__":
    D_MODEL = 32
    key = jax.random.PRNGKey(0)

    # (2, 8): evenly tiled grid.  (3, 5): ragged last row block (masked stores).
    for (B, L) in ((2, 8), (3, 5)):
        for freq in ('h', 't'):
            n_feat = 5 if freq == 't' else 4
            cols = []
            for col in range(n_feat):
                key, sub = jax.random.split(key)
                cols.append(jax.random.randint(sub, (B, L), 0, _VOCAB_SIZES[col],
                                               dtype=jnp.int32))
            x_mark = jnp.stack(cols, axis=-1)            # (B, L, 4) or (B, L, 5)

            fused_table, offsets = make_temporal_embedding_params(D_MODEL, freq=freq)
            out = temporal_embedding(x_mark, fused_table, offsets, D_MODEL)
            out = jax.block_until_ready(out)

            ref = _reference(x_mark, D_MODEL, freq=freq)
            assert out.shape == (B, L, D_MODEL)
            assert out.dtype == jnp.float32
            assert jnp.allclose(out, ref, atol=1e-5, rtol=1e-5), (
                B, L, freq, float(jnp.max(jnp.abs(out - ref))))

    # Optional bf16 output path (halves the dominant HBM write traffic when the
    # downstream consumer accepts bf16) — looser tolerance by construction.
    out_bf16 = temporal_embedding(x_mark, fused_table, offsets, D_MODEL,
                                  out_dtype=jnp.bfloat16)
    out_bf16 = jax.block_until_ready(out_bf16)
    assert out_bf16.dtype == jnp.bfloat16
    assert jnp.allclose(out_bf16.astype(jnp.float32), ref, atol=5e-2, rtol=5e-2)

    print("KERNEL_OK")
</pallas_src>

<mosaic_0001>
module attributes {stable_mosaic.version = 11 : i64} {
  func.func @_temporal_embed_kernel(%arg0: i32, %arg1: memref<8x4xi32, #tpu.memory_space<vmem>>, %arg2: memref<128x32xf32, #tpu.memory_space<vmem>>, %arg3: memref<8x32xf32, #tpu.memory_space<vmem>>) attributes {dimension_semantics = [#tpu.dimension_semantics<parallel>], iteration_bounds = array<i64: 2>, scalar_prefetch = 0 : i64, scratch_operands = 0 : i64, tpu.core_type = #tpu.core_type<tc>, window_params = [{transform_indices = @transform_0, window_bounds = array<i64: 8, 4>}, {pipeline_mode = #tpu.pipeline_mode<synchronous>, transform_indices = @transform_1, window_bounds = array<i64: 128, 32>}, {transform_indices = @transform_2, window_bounds = array<i64: 8, 32>}]} {
    %c0 = arith.constant 0 : index
    %c0_0 = arith.constant 0 : index
    %0 = vector.load %arg1[%c0, %c0_0] : memref<8x4xi32, #tpu.memory_space<vmem>>, vector<8x4xi32>
    %1 = tpu.iota {dimensions = array<i32: 1>} : vector<1x128xi32>
    %2 = vector.extract_strided_slice %0 {offsets = [0, 0], sizes = [8, 1], strides = [1, 1]} : vector<8x4xi32> to vector<8x1xi32>
    %3 = vector.broadcast %1 : vector<1x128xi32> to vector<8x128xi32>
    %4 = vector.broadcast %2 : vector<8x1xi32> to vector<8x128xi32>
    %5 = arith.cmpi eq, %3, %4 : vector<8x128xi32>
    %6 = vector.extract_strided_slice %0 {offsets = [0, 1], sizes = [8, 1], strides = [1, 1]} : vector<8x4xi32> to vector<8x1xi32>
    %7 = vector.broadcast %1 : vector<1x128xi32> to vector<8x128xi32>
    %8 = vector.broadcast %6 : vector<8x1xi32> to vector<8x128xi32>
    %9 = arith.cmpi eq, %7, %8 : vector<8x128xi32>
    %10 = arith.ori %5, %9 : vector<8x128xi1>
    %11 = vector.extract_strided_slice %0 {offsets = [0, 2], sizes = [8, 1], strides = [1, 1]} : vector<8x4xi32> to vector<8x1xi32>
    %12 = vector.broadcast %1 : vector<1x128xi32> to vector<8x128xi32>
    %13 = vector.broadcast %11 : vector<8x1xi32> to vector<8x128xi32>
    %14 = arith.cmpi eq, %12, %13 : vector<8x128xi32>
    %15 = arith.ori %10, %14 : vector<8x128xi1>
    %16 = vector.extract_strided_slice %0 {offsets = [0, 3], sizes = [8, 1], strides = [1, 1]} : vector<8x4xi32> to vector<8x1xi32>
    %17 = vector.broadcast %1 : vector<1x128xi32> to vector<8x128xi32>
    %18 = vector.broadcast %16 : vector<8x1xi32> to vector<8x128xi32>
    %19 = arith.cmpi eq, %17, %18 : vector<8x128xi32>
    %20 = arith.ori %15, %19 : vector<8x128xi1>
    %21 = arith.extui %20 : vector<8x128xi1> to vector<8x128xi32>
    %22 = arith.sitofp %21 : vector<8x128xi32> to vector<8x128xf32>
    %c0_1 = arith.constant 0 : index
    %c0_2 = arith.constant 0 : index
    %23 = vector.load %arg2[%c0_1, %c0_2] : memref<128x32xf32, #tpu.memory_space<vmem>>, vector<128x32xf32>
    %cst = arith.constant dense<0.000000e+00> : vector<8x32xf32>
    %24 = tpu.matmul %22, %23, %cst {dimension_numbers = #tpu.dot_dimension_numbers<[1], [0], [0], [1], [0, 0, 1, 1], [], []>, precision = #tpu.contract_precision<fp32>} : vector<8x128xf32>, vector<128x32xf32>, vector<8x32xf32> -> vector<8x32xf32>
    %c0_3 = arith.constant 0 : index
    %c0_4 = arith.constant 0 : index
    %25 = vector.load %arg3[%c0_3, %c0_4] : memref<8x32xf32, #tpu.memory_space<vmem>>, vector<8x32xf32>
    tpu.vector_store %arg3[%c0_3, %c0_4], %24 {strides = array<i32>} : memref<8x32xf32, #tpu.memory_space<vmem>>, vector<8x32xf32>,
    return
  }
  func.func @transform_0(%arg0: i32) -> (i32, i32) {
    %c0_i32 = arith.constant 0 : i32
    %c0_i32_0 = arith.constant 0 : i32
    return %arg0, %c0_i32 : i32, i32
  }
  func.func @transform_1(%arg0: i32) -> (i32, i32) {
    %c0_i32 = arith.constant 0 : i32
    %c0_i32_0 = arith.constant 0 : i32
    %c0_i32_1 = arith.constant 0 : i32
    return %c0_i32, %c0_i32_0 : i32, i32
  }
  func.func @transform_2(%arg0: i32) -> (i32, i32) {
    %c0_i32 = arith.constant 0 : i32
    %c0_i32_0 = arith.constant 0 : i32
    return %arg0, %c0_i32 : i32, i32
  }
}

</mosaic_0001>

<llo_original>
// kernel: tpu_custom_call.1
$region0: #{tpu_custom_call.1}
  #allocation0 [shape = 'u32[]', space=smem, size = 0x4, offset = 0x4, fixed_abs, tag = 'smem constant byte address 0x4 - core index']
  #allocation1 [shape = 'u32[144,128]{1,0:T(1,128)}', space=vmem, size = 0x12000, scoped, tag = 'internal scratch']
  %s0 = inlined_call_operand.vmem [shape: s32[16,4], index: 0, kind: input, shape index: {}]
  %s1 = inlined_call_operand.vmem [shape: f32[128,32], index: 1, kind: input, shape index: {}]
  %s2 = inlined_call_operand.hbm [shape: f32[16,32], index: 2, kind: output, shape index: {}]
  %s3 = sld [smem:[#allocation0]]
  $region41: #{tpu_custom_call.1} parent=0
    _
  %s5 = ssub.s32 1, %s3
  %s6 = scalar_select 0, %s5, %s3
  $region1: #{tpu_custom_call.1} parent=0
    #allocation2 [shape = 'u8[8192]{0}', space=vmem, size = 0x2000, scoped, tag = 'output window, operand 0']
    #allocation3 [shape = 's32[2]{0}', space=sflag, size = 0x8, scoped, tag = 'scoped memory for tpu_custom_call.1']
    %7 = vsyncpa [#allocation3], 0
    %s8 = scalar_lea.sflag [#allocation3], 1
    %9 = vsyncpa %s8, 0
    loop: start=0, step=1, limit=4
    $region2: #{tpu_custom_call.1} parent=1 // loop_pre_header
      _
    $region3: #{tpu_custom_call.1} parent=1 // loop_header
      %s11 = sphi 0, %s15
      %p12 = scmp.ge.s32.totalorder %s11, 4
      %s21 = sphi 0, %s23
      %s24 = sphi 0, %s21
      %s25 = sphi 0, %s24
      %s41 = sphi 0, %s25
      %s45 = sphi 0, %s45
      %s47 = sphi 0, %s45
      %s48 = sphi 0, %s47
      %s62 = sphi 0, %s48
      %s68 = sphi 0, %s70
      %s71 = sphi 0, %s68
      %s72 = sphi 0, %s71
      %s88 = sphi 0, %s72
    $region4: #{tpu_custom_call.1} parent=1 // loop_header_branch
      %14 = sbr.rel (%p12) target = $region8
    $region5: #{tpu_custom_call.1} parent=1 // loop_body
      %s16 = ssub.s32 %s11, 1
      %s17 = ssub.s32 %s11, 2
      %s18 = sadd.s32 %s11, 1
      %s19 = ssub.s32 %s11, %s18
      %p20 = scmp.eq.s32.totalorder %s19, 0
      %s22 = sadd.s32 %s21, 1
      %s23 = scalar_select %p20, %s21, %s22
      %p26 = pneg %p20
      %p27 = scmp.eq.s32.totalorder %s11, 1
      %p28 = por %p26, %p27
      %p29 = scmp.ne.s32.totalorder %s21, %s24
      %p30 = scmp.eq.s32.totalorder %s11, 0
      %p31 = por %p29, %p30
      %p32 = scmp.ne.s32.totalorder %s21, %s24
      %p33 = scmp.eq.s32.totalorder %s16, 1
      %p34 = por %p32, %p33
      %p35 = scmp.ne.s32.totalorder %s24, %s25
      %p36 = scmp.eq.s32.totalorder %s16, 0
      %p37 = por %p35, %p36
      %p38 = scmp.ne.s32.totalorder %s24, %s25
      %p39 = scmp.eq.s32.totalorder %s17, 1
      %p40 = por %p38, %p39
      %p42 = scmp.ne.s32.totalorder %s25, %s41
      %p43 = scmp.eq.s32.totalorder %s17, 0
      %p44 = por %p42, %p43
      %s46 = sadd.s32 %s45, 1
      %p49 = scmp.eq.s32.totalorder %s11, 1
      %p50 = scmp.ne.s32.totalorder %s45, %s47
      %p51 = scmp.eq.s32.totalorder %s11, 0
      %p52 = por %p50, %p51
      %p53 = scmp.ne.s32.totalorder %s45, %s47
      %p54 = scmp.eq.s32.totalorder %s16, 1
      %p55 = por %p53, %p54
      %p56 = scmp.ne.s32.totalorder %s47, %s48
      %p57 = scmp.eq.s32.totalorder %s16, 0
      %p58 = por %p56, %p57
      %p59 = scmp.ne.s32.totalorder %s47, %s48
      %p60 = scmp.eq.s32.totalorder %s17, 1
      %p61 = por %p59, %p60
      %p63 = scmp.ne.s32.totalorder %s48, %s62
      %p64 = scmp.eq.s32.totalorder %s17, 0
      %p65 = por %p63, %p64
      %s66 = ssub.s32 %s11, %s18
      %p67 = scmp.eq.s32.totalorder %s66, 0
      %s69 = sadd.s32 %s68, 1
      %s70 = scalar_select %p67, %s68, %s69
      %p73 = pneg %p67
      %p74 = scmp.eq.s32.totalorder %s11, 1
      %p75 = por %p73, %p74
      %p76 = scmp.ne.s32.totalorder %s68, %s71
      %p77 = scmp.eq.s32.totalorder %s11, 0
      %p78 = por %p76, %p77
      %p79 = scmp.ne.s32.totalorder %s68, %s71
      %p80 = scmp.eq.s32.totalorder %s16, 1
      %p81 = por %p79, %p80
      %p82 = scmp.ne.s32.totalorder %s71, %s72
      %p83 = scmp.eq.s32.totalorder %s16, 0
      %p84 = por %p82, %p83
      %p85 = scmp.ne.s32.totalorder %s71, %s72
      %p86 = scmp.eq.s32.totalorder %s17, 1
      %p87 = por %p85, %p86
      %p89 = scmp.ne.s32.totalorder %s72, %s88
      %p90 = scmp.eq.s32.totalorder %s17, 0
      %p91 = por %p89, %p90
      %p92 = scmp.le.s32.totalorder 1, %s11
      %p93 = scmp.lt.s32.totalorder %s11, 3
      %p94 = pnand %p92, %p93
      %p95 = pneg %p94
      // Predicated region
      $region9: #{tpu_custom_call.1} parent=5 // pred_check
        _
      $region10: #{tpu_custom_call.1} parent=5 // pred_check_branch
        %97 = sbr.rel (%p94) target = $region12
      $region11: #{tpu_custom_call.1} parent=5 // pred_region
        %s98 = ssub.s32 %s11, 1
        // Predicated region
        $region13: #{tpu_custom_call.1} parent=11 // pred_check
          %p99 = pneg %p58
        $region14: #{tpu_custom_call.1} parent=11 // pred_check_branch
          %101 = sbr.rel (%p99) target = $region16
        $region15: #{tpu_custom_call.1} parent=11 // pred_region
          _
        $region16: #{tpu_custom_call.1} parent=11 // pred_fallthru
          _
      $region12: #{tpu_custom_call.1} parent=5 // pred_fallthru
        _
      %p102 = scmp.lt.s32.totalorder %s11, 2
      // Predicated region
      $region17: #{tpu_custom_call.1} parent=5 // pred_check
        %p103 = pneg %p102
      $region18: #{tpu_custom_call.1} parent=5 // pred_check_branch
        %105 = sbr.rel (%p103) target = $region20
      $region19: #{tpu_custom_call.1} parent=5 // pred_region
        // Predicated region
        $region21: #{tpu_custom_call.1} parent=19 // pred_check
          %p106 = pneg %p31
        $region22: #{tpu_custom_call.1} parent=19 // pred_check_branch
          %108 = sbr.rel (%p106) target = $region24
        $region23: #{tpu_custom_call.1} parent=19 // pred_region
          %p109 = scmp.lt.s32.totalorder %s11, 1
          %s110 = scalar_select %p109, %s11, 1
          %s111 = smul.addr %s110, 8
          %s112 = scalar_lea.vmem %s0, %s111
        $region24: #{tpu_custom_call.1} parent=19 // pred_fallthru
          _
      $region20: #{tpu_custom_call.1} parent=5 // pred_fallthru
        _
      %p113 = scmp.le.s32.totalorder 1, %s11
      %p114 = scmp.lt.s32.totalorder %s11, 3
      %p115 = pnand %p113, %p114
      %p116 = pneg %p115
      // Predicated region
      $region25: #{tpu_custom_call.1} parent=5 // pred_check
        _
      $region26: #{tpu_custom_call.1} parent=5 // pred_check_branch
        %118 = sbr.rel (%p115) target = $region28
      $region27: #{tpu_custom_call.1} parent=5 // pred_region
        %s119 = ssub.s32 %s11, 1
        %p120 = scmp.lt.s32.totalorder %s16, 1
        %s121 = scalar_select %p120, %s16, 1
        %s122 = smul.addr %s121, 8
        %s123 = scalar_lea.vmem %s0, %s122
        %p124 = pneg %p37
        %p125 = pneg %p34
        %p126 = pneg %p58
        %p127 = pneg %p55
        %p128 = pneg %p84
        %p129 = pneg %p81
        %s130 = sand.u32 %s71, 1
        %s131 = scalar_lea.sflag [#allocation3], %s130
        %s132 = sand.u32 %s71, 1
        %s133 = smul.addr %s132, 8
        %s134 = scalar_lea.vmem [#allocation2], %s133
        %p135 = scmp.lt.s32.totalorder %s16, 1
        %s136 = scalar_select %p135, %s16, 1
        %s137 = smul.addr %s136, 8
        %s138 = scalar_lea.vmem %s0, %s137
        %v139 = vld [vmem:[%s138] sm:$0xff]
        %v140 = vlaneseq
        %v141 = vand.u32 %v140, 127
        %142 = vset.pattern.permute.xlu0 0
        %143 = vperm.xlu0 %142, %v139
        %v144 = vpop.permute.xlu0 %143
        %vm145 = vcmp.eq.s32.totalorder %v141, %v144
        %146 = vset.pattern.permute.xlu0 1
        %147 = vperm.xlu0 %146, %v139
        %v148 = vpop.permute.xlu0 %147
        %vm149 = vcmp.eq.s32.totalorder %v141, %v148
        %vm150 = vmor %vm145, %vm149
        %151 = vset.pattern.permute.xlu0 2
        %152 = vperm.xlu0 %151, %v139
        %v153 = vpop.permute.xlu0 %152
        %vm154 = vcmp.eq.s32.totalorder %v141, %v153
        %vm155 = vmor %vm150, %vm154
        %156 = vset.pattern.permute.xlu0 3
        %157 = vperm.xlu0 %156, %v139
        %v158 = vpop.permute.xlu0 %157
        %vm159 = vcmp.eq.s32.totalorder %v141, %v158
        %vm160 = vmor %vm155, %vm159
        %v161 = vsel %vm160, 1, 0
        %v162 = vcvt.s32.f32 %v161
        %v163 = vld [vmem:[%s1] sm:$0xff]
        %v164 = vld [vmem:[%s1 + $0x8] sm:$0xff]
        %v165 = vld [vmem:[%s1 + $0x10] sm:$0xff]
        %v166 = vld [vmem:[%s1 + $0x18] sm:$0xff]
        %v167 = vld [vmem:[%s1 + $0x20] sm:$0xff]
        %v168 = vld [vmem:[%s1 + $0x28] sm:$0xff]
        %v169 = vld [vmem:[%s1 + $0x30] sm:$0xff]
        %v170 = vld [vmem:[%s1 + $0x38] sm:$0xff]
        %v171 = vld [vmem:[%s1 + $0x40] sm:$0xff]
        %v172 = vld [vmem:[%s1 + $0x48] sm:$0xff]
        %v173 = vld [vmem:[%s1 + $0x50] sm:$0xff]
        %v174 = vld [vmem:[%s1 + $0x58] sm:$0xff]
        %v175 = vld [vmem:[%s1 + $0x60] sm:$0xff]
        %v176 = vld [vmem:[%s1 + $0x68] sm:$0xff]
        %v177 = vld [vmem:[%s1 + $0x70] sm:$0xff]
        %v178 = vld [vmem:[%s1 + $0x78] sm:$0xff]
        %179 = vmatprep.subr.mxu0 0.0
        %v180 = vand.u32 %v163, 4294901760
        %181 = vmatpush1.msra.mxu0 %v180
        %182 = vmatprep.subr.mxu0 0.0
        %v183 = vand.u32 %v164, 4294901760
        %184 = vmatpush1.msra.mxu0 %v183
        %185 = vmatprep.subr.mxu0 0.0
        %v186 = vand.u32 %v165, 4294901760
        %187 = vmatpush1.msra.mxu0 %v186
        %188 = vmatprep.subr.mxu0 0.0
        %v189 = vand.u32 %v166, 4294901760
        %190 = vmatpush1.msra.mxu0 %v189
        %191 = vmatprep.subr.mxu0 0.0
        %v192 = vand.u32 %v167, 4294901760
        %193 = vmatpush1.msra.mxu0 %v192
        %194 = vmatprep.subr.mxu0 0.0
        %v195 = vand.u32 %v168, 4294901760
        %196 = vmatpush1.msra.mxu0 %v195
        %197 = vmatprep.subr.mxu0 0.0
        %v198 = vand.u32 %v169, 4294901760
        %199 = vmatpush1.msra.mxu0 %v198
        %200 = vmatprep.subr.mxu0 0.0
        %v201 = vand.u32 %v170, 4294901760
        %202 = vmatpush1.msra.mxu0 %v201
        %203 = vmatprep.subr.mxu0 0.0
        %v204 = vand.u32 %v171, 4294901760
        %205 = vmatpush1.msra.mxu0 %v204
        %206 = vmatprep.subr.mxu0 0.0
        %v207 = vand.u32 %v172, 4294901760
        %208 = vmatpush1.msra.mxu0 %v207
        %209 = vmatprep.subr.mxu0 0.0
        %v210 = vand.u32 %v173, 4294901760
        %211 = vmatpush1.msra.mxu0 %v210
        %212 = vmatprep.subr.mxu0 0.0
        %v213 = vand.u32 %v174, 4294901760
        %214 = vmatpush1.msra.mxu0 %v213
        %215 = vmatprep.subr.mxu0 0.0
        %v216 = vand.u32 %v175, 4294901760
        %217 = vmatpush1.msra.mxu0 %v216
        %218 = vmatprep.subr.mxu0 0.0
        %v219 = vand.u32 %v176, 4294901760
        %220 = vmatpush1.msra.mxu0 %v219
        %221 = vmatprep.subr.mxu0 0.0
        %v222 = vand.u32 %v177, 4294901760
        %223 = vmatpush1.msra.mxu0 %v222
        %224 = vmatprep.subr.mxu0 0.0
        %v225 = vand.u32 %v178, 4294901760
        %226 = vmatpush1.msra.mxu0 %v225
        %227 = vmatprep.subr.mxu0 0.0
        %228 = vmatpush1.msra.mxu0 0.0
        %229 = vmatprep.subr.mxu0 0.0
        %230 = vmatpush1.msra.mxu0 0.0
        %231 = vmatprep.subr.mxu0 0.0
        %232 = vmatpush1.msra.mxu0 0.0
        %233 = vmatprep.subr.mxu0 0.0
        %234 = vmatpush1.msra.mxu0 0.0
        %235 = vmatprep.subr.mxu0 0.0
        %236 = vmatpush1.msra.mxu0 0.0
        %237 = vmatprep.subr.mxu0 0.0
        %238 = vmatpush1.msra.mxu0 0.0
        %239 = vmatprep.subr.mxu0 0.0
        %240 = vmatpush1.msra.mxu0 0.0
        %241 = vmatprep.subr.mxu0 0.0
        %242 = vmatpush1.msra.mxu0 0.0
        %243 = vmatprep.subr.mxu0 0.0
        %244 = vmatpush1.msra.mxu0 0.0
        %245 = vmatprep.subr.mxu0 0.0
        %246 = vmatpush1.msra.mxu0 0.0
        %247 = vmatprep.subr.mxu0 0.0
        %248 = vmatpush1.msra.mxu0 0.0
        %249 = vmatprep.subr.mxu0 0.0
        %250 = vmatpush1.msra.mxu0 0.0
        %251 = vmatprep.subr.mxu0 0.0
        %252 = vmatpush1.msra.mxu0 0.0
        %253 = vmatprep.subr.mxu0 0.0
        %254 = vmatpush1.msra.mxu0 0.0
        %255 = vmatprep.subr.mxu0 0.0
        %256 = vmatpush1.msra.mxu0 0.0
        %257 = vmatprep.subr.mxu0 0.0
        %258 = vmatpush1.msra.mxu0 0.0
        %259 = vmatprep.mubr.f32.mxu0 0.0
        %v260 = vand.u32 %v162, 4294901760
        %v261 = vsub.f32 %v162, %v260
        %v262 = vand.u32 %v261, 4294901760
        %v263 = vsub.f32 %v261, %v262
        %v264 = vand.u32 %v263, 4294901760
        %265 = vmatmul.mubr.f32.gmra.mrb[0].mxu0 %v264
        %v266 = vpop.f32.mrb[0].mxu0
        %v267 = vadd.f32 0.0, %v266
        %v268 = vpop.f32.mrb[0].mxu0
        %269 = vdwg.mxu0
        %270 = vmatprep.subr.mxu0 0.0
        %v271 = vand.u32 %v163, 4294901760
        %v272 = vsub.f32 %v163, %v271
        %v273 = vand.u32 %v272, 4294901760
        %v274 = vsub.f32 %v272, %v273
        %v275 = vand.u32 %v274, 4294901760
        %276 = vmatpush1.msra.mxu0 %v275
        %277 = vmatprep.subr.mxu0 0.0
        %v278 = vand.u32 %v164, 4294901760
        %v279 = vsub.f32 %v164, %v278
        %v280 = vand.u32 %v279, 4294901760
        %v281 = vsub.f32 %v279, %v280
        %v282 = vand.u32 %v281, 4294901760
        %283 = vmatpush1.msra.mxu0 %v282
        %284 = vmatprep.subr.mxu0 0.0
        %v285 = vand.u32 %v165, 4294901760
        %v286 = vsub.f32 %v165, %v285
        %v287 = vand.u32 %v286, 4294901760
        %v288 = vsub.f32 %v286, %v287
        %v289 = vand.u32 %v288, 4294901760
        %290 = vmatpush1.msra.mxu0 %v289
        %291 = vmatprep.subr.mxu0 0.0
        %v292 = vand.u32 %v166, 4294901760
        %v293 = vsub.f32 %v166, %v292
        %v294 = vand.u32 %v293, 4294901760
        %v295 = vsub.f32 %v293, %v294
        %v296 = vand.u32 %v295, 4294901760
        %297 = vmatpush1.msra.mxu0 %v296
        %298 = vmatprep.subr.mxu0 0.0
        %v299 = vand.u32 %v167, 4294901760
        %v300 = vsub.f32 %v167, %v299
        %v301 = vand.u32 %v300, 4294901760
        %v302 = vsub.f32 %v300, %v301
        %v303 = vand.u32 %v302, 4294901760
        %304 = vmatpush1.msra.mxu0 %v303
        %305 = vmatprep.subr.mxu0 0.0
        %v306 = vand.u32 %v168, 4294901760
        %v307 = vsub.f32 %v168, %v306
        %v308 = vand.u32 %v307, 4294901760
        %v309 = vsub.f32 %v307, %v308
        %v310 = vand.u32 %v309, 4294901760
        %311 = vmatpush1.msra.mxu0 %v310
        %312 = vmatprep.subr.mxu0 0.0
        %v313 = vand.u32 %v169, 4294901760
        %v314 = vsub.f32 %v169, %v313
        %v315 = vand.u32 %v314, 4294901760
        %v316 = vsub.f32 %v314, %v315
        %v317 = vand.u32 %v316, 4294901760
        %318 = vmatpush1.msra.mxu0 %v317
        %319 = vmatprep.subr.mxu0 0.0
        %v320 = vand.u32 %v170, 4294901760
        %v321 = vsub.f32 %v170, %v320
        %v322 = vand.u32 %v321, 4294901760
        %v323 = vsub.f32 %v321, %v322
        %v324 = vand.u32 %v323, 4294901760
        %325 = vmatpush1.msra.mxu0 %v324
        %326 = vmatprep.subr.mxu0 0.0
        %v327 = vand.u32 %v171, 4294901760
        %v328 = vsub.f32 %v171, %v327
        %v329 = vand.u32 %v328, 4294901760
        %v330 = vsub.f32 %v328, %v329
        %v331 = vand.u32 %v330, 4294901760
        %332 = vmatpush1.msra.mxu0 %v331
        %333 = vmatprep.subr.mxu0 0.0
        %v334 = vand.u32 %v172, 4294901760
        %v335 = vsub.f32 %v172, %v334
        %v336 = vand.u32 %v335, 4294901760
        %v337 = vsub.f32 %v335, %v336
        %v338 = vand.u32 %v337, 4294901760
        %339 = vmatpush1.msra.mxu0 %v338
        %340 = vmatprep.subr.mxu0 0.0
        %v341 = vand.u32 %v173, 4294901760
        %v342 = vsub.f32 %v173, %v341
        %v343 = vand.u32 %v342, 4294901760
        %v344 = vsub.f32 %v342, %v343
        %v345 = vand.u32 %v344, 4294901760
        %346 = vmatpush1.msra.mxu0 %v345
        %347 = vmatprep.subr.mxu0 0.0
        %v348 = vand.u32 %v174, 4294901760
        %v349 = vsub.f32 %v174, %v348
        %v350 = vand.u32 %v349, 4294901760
        %v351 = vsub.f32 %v349, %v350
        %v352 = vand.u32 %v351, 4294901760
        %353 = vmatpush1.msra.mxu0 %v352
        %354 = vmatprep.subr.mxu0 0.0
        %v355 = vand.u32 %v175, 4294901760
        %v356 = vsub.f32 %v175, %v355
        %v357 = vand.u32 %v356, 4294901760
        %v358 = vsub.f32 %v356, %v357
        %v359 = vand.u32 %v358, 4294901760
        %360 = vmatpush1.msra.mxu0 %v359
        %361 = vmatprep.subr.mxu0 0.0
        %v362 = vand.u32 %v176, 4294901760
        %v363 = vsub.f32 %v176, %v362
        %v364 = vand.u32 %v363, 4294901760
        %v365 = vsub.f32 %v363, %v364
        %v366 = vand.u32 %v365, 4294901760
        %367 = vmatpush1.msra.mxu0 %v366
        %368 = vmatprep.subr.mxu0 0.0
        %v369 = vand.u32 %v177, 4294901760
        %v370 = vsub.f32 %v177, %v369
        %v371 = vand.u32 %v370, 4294901760
        %v372 = vsub.f32 %v370, %v371
        %v373 = vand.u32 %v372, 4294901760
        %374 = vmatpush1.msra.mxu0 %v373
        %375 = vmatprep.subr.mxu0 0.0
        %v376 = vand.u32 %v178, 4294901760
        %v377 = vsub.f32 %v178, %v376
        %v378 = vand.u32 %v377, 4294901760
        %v379 = vsub.f32 %v377, %v378
        %v380 = vand.u32 %v379, 4294901760
        %381 = vmatpush1.msra.mxu0 %v380
        %382 = vmatprep.subr.mxu0 0.0
        %383 = vmatpush1.msra.mxu0 0.0
        %384 = vmatprep.subr.mxu0 0.0
        %385 = vmatpush1.msra.mxu0 0.0
        %386 = vmatprep.subr.mxu0 0.0
        %387 = vmatpush1.msra.mxu0 0.0
        %388 = vmatprep.subr.mxu0 0.0
        %389 = vmatpush1.msra.mxu0 0.0
        %390 = vmatprep.subr.mxu0 0.0
        %391 = vmatpush1.msra.mxu0 0.0
        %392 = vmatprep.subr.mxu0 0.0
        %393 = vmatpush1.msra.mxu0 0.0
        %394 = vmatprep.subr.mxu0 0.0
        %395 = vmatpush1.msra.mxu0 0.0
        %396 = vmatprep.subr.mxu0 0.0
        %397 = vmatpush1.msra.mxu0 0.0
        %398 = vmatprep.subr.mxu0 0.0
        %399 = vmatpush1.msra.mxu0 0.0
        %400 = vmatprep.subr.mxu0 0.0
        %401 = vmatpush1.msra.mxu0 0.0
        %402 = vmatprep.subr.mxu0 0.0
        %403 = vmatpush1.msra.mxu0 0.0
        %404 = vmatprep.subr.mxu0 0.0
        %405 = vmatpush1.msra.mxu0 0.0
        %406 = vmatprep.subr.mxu0 0.0
        %407 = vmatpush1.msra.mxu0 0.0
        %408 = vmatprep.subr.mxu0 0.0
        %409 = vmatpush1.msra.mxu0 0.0
        %410 = vmatprep.subr.mxu0 0.0
        %411 = vmatpush1.msra.mxu0 0.0
        %412 = vmatprep.subr.mxu0 0.0
        %413 = vmatpush1.msra.mxu0 0.0
        %414 = vmatprep.mubr.f32.mxu0 0.0
        %v415 = vand.u32 %v162, 4294901760
        %416 = vmatmul.mubr.f32.gmra.mrb[0].mxu0 %v415
        %v417 = vpop.f32.mrb[0].mxu0
        %v418 = vadd.f32 %v267, %v417
        %v419 = vpop.f32.mrb[0].mxu0
        %420 = vdwg.mxu0
        %421 = vmatprep.subr.mxu0 0.0
        %v422 = vand.u32 %v163, 4294901760
        %v423 = vsub.f32 %v163, %v422
        %424 = vmatpush1.msra.mxu0 %v423
        %425 = vmatprep.subr.mxu0 0.0
        %v426 = vand.u32 %v164, 4294901760
        %v427 = vsub.f32 %v164, %v426
        %428 = vmatpush1.msra.mxu0 %v427
        %429 = vmatprep.subr.mxu0 0.0
        %v430 = vand.u32 %v165, 4294901760
        %v431 = vsub.f32 %v165, %v430
        %432 = vmatpush1.msra.mxu0 %v431
        %433 = vmatprep.subr.mxu0 0.0
        %v434 = vand.u32 %v166, 4294901760
        %v435 = vsub.f32 %v166, %v434
        %436 = vmatpush1.msra.mxu0 %v435
        %437 = vmatprep.subr.mxu0 0.0
        %v438 = vand.u32 %v167, 4294901760
        %v439 = vsub.f32 %v167, %v438
        %440 = vmatpush1.msra.mxu0 %v439
        %441 = vmatprep.subr.mxu0 0.0
        %v442 = vand.u32 %v168, 4294901760
        %v443 = vsub.f32 %v168, %v442
        %444 = vmatpush1.msra.mxu0 %v443
        %445 = vmatprep.subr.mxu0 0.0
        %v446 = vand.u32 %v169, 4294901760
        %v447 = vsub.f32 %v169, %v446
        %448 = vmatpush1.msra.mxu0 %v447
        %449 = vmatprep.subr.mxu0 0.0
        %v450 = vand.u32 %v170, 4294901760
        %v451 = vsub.f32 %v170, %v450
        %452 = vmatpush1.msra.mxu0 %v451
        %453 = vmatprep.subr.mxu0 0.0
        %v454 = vand.u32 %v171, 4294901760
        %v455 = vsub.f32 %v171, %v454
        %456 = vmatpush1.msra.mxu0 %v455
        %457 = vmatprep.subr.mxu0 0.0
        %v458 = vand.u32 %v172, 4294901760
        %v459 = vsub.f32 %v172, %v458
        %460 = vmatpush1.msra.mxu0 %v459
        %461 = vmatprep.subr.mxu0 0.0
        %v462 = vand.u32 %v173, 4294901760
        %v463 = vsub.f32 %v173, %v462
        %464 = vmatpush1.msra.mxu0 %v463
        %465 = vmatprep.subr.mxu0 0.0
        %v466 = vand.u32 %v174, 4294901760
        %v467 = vsub.f32 %v174, %v466
        %468 = vmatpush1.msra.mxu0 %v467
        %469 = vmatprep.subr.mxu0 0.0
        %v470 = vand.u32 %v175, 4294901760
        %v471 = vsub.f32 %v175, %v470
        %472 = vmatpush1.msra.mxu0 %v471
        %473 = vmatprep.subr.mxu0 0.0
        %v474 = vand.u32 %v176, 4294901760
        %v475 = vsub.f32 %v176, %v474
        %476 = vmatpush1.msra.mxu0 %v475
        %477 = vmatprep.subr.mxu0 0.0
        %v478 = vand.u32 %v177, 4294901760
        %v479 = vsub.f32 %v177, %v478
        %480 = vmatpush1.msra.mxu0 %v479
        %481 = vmatprep.subr.mxu0 0.0
        %v482 = vand.u32 %v178, 4294901760
        %v483 = vsub.f32 %v178, %v482
        %484 = vmatpush1.msra.mxu0 %v483
        %485 = vmatprep.subr.mxu0 0.0
        %486 = vmatpush1.msra.mxu0 0.0
        %487 = vmatprep.subr.mxu0 0.0
        %488 = vmatpush1.msra.mxu0 0.0
        %489 = vmatprep.subr.mxu0 0.0
        %490 = vmatpush1.msra.mxu0 0.0
        %491 = vmatprep.subr.mxu0 0.0
        %492 = vmatpush1.msra.mxu0 0.0
        %493 = vmatprep.subr.mxu0 0.0
        %494 = vmatpush1.msra.mxu0 0.0
        %495 = vmatprep.subr.mxu0 0.0
        %496 = vmatpush1.msra.mxu0 0.0
        %497 = vmatprep.subr.mxu0 0.0
        %498 = vmatpush1.msra.mxu0 0.0
        %499 = vmatprep.subr.mxu0 0.0
        %500 = vmatpush1.msra.mxu0 0.0
        %501 = vmatprep.subr.mxu0 0.0
        %502 = vmatpush1.msra.mxu0 0.0
        %503 = vmatprep.subr.mxu0 0.0
        %504 = vmatpush1.msra.mxu0 0.0
        %505 = vmatprep.subr.mxu0 0.0
        %506 = vmatpush1.msra.mxu0 0.0
        %507 = vmatprep.subr.mxu0 0.0
        %508 = vmatpush1.msra.mxu0 0.0
        %509 = vmatprep.subr.mxu0 0.0
        %510 = vmatpush1.msra.mxu0 0.0
        %511 = vmatprep.subr.mxu0 0.0
        %512 = vmatpush1.msra.mxu0 0.0
        %513 = vmatprep.subr.mxu0 0.0
        %514 = vmatpush1.msra.mxu0 0.0
        %515 = vmatprep.subr.mxu0 0.0
        %516 = vmatpush1.msra.mxu0 0.0
        %517 = vmatprep.mubr.f32.mxu0 0.0
        %v518 = vand.u32 %v162, 4294901760
        %v519 = vsub.f32 %v162, %v518
        %520 = vmatmul.mubr.f32.gmra.mrb[0].mxu0 %v519
        %v521 = vpop.f32.mrb[0].mxu0
        %v522 = vadd.f32 %v418, %v521
        %v523 = vpop.f32.mrb[0].mxu0
        %524 = vdwg.mxu0
        %525 = vmatprep.subr.mxu0 0.0
        %v526 = vand.u32 %v163, 4294901760
        %527 = vmatpush1.msra.mxu0 %v526
        %528 = vmatprep.subr.mxu0 0.0
        %v529 = vand.u32 %v164, 4294901760
        %530 = vmatpush1.msra.mxu0 %v529
        %531 = vmatprep.subr.mxu0 0.0
        %v532 = vand.u32 %v165, 4294901760
        %533 = vmatpush1.msra.mxu0 %v532
        %534 = vmatprep.subr.mxu0 0.0
        %v535 = vand.u32 %v166, 4294901760
        %536 = vmatpush1.msra.mxu0 %v535
        %537 = vmatprep.subr.mxu0 0.0
        %v538 = vand.u32 %v167, 4294901760
        %539 = vmatpush1.msra.mxu0 %v538
        %540 = vmatprep.subr.mxu0 0.0
        %v541 = vand.u32 %v168, 4294901760
        %542 = vmatpush1.msra.mxu0 %v541
        %543 = vmatprep.subr.mxu0 0.0
        %v544 = vand.u32 %v169, 4294901760
        %545 = vmatpush1.msra.mxu0 %v544
        %546 = vmatprep.subr.mxu0 0.0
        %v547 = vand.u32 %v170, 4294901760
        %548 = vmatpush1.msra.mxu0 %v547
        %549 = vmatprep.subr.mxu0 0.0
        %v550 = vand.u32 %v171, 4294901760
        %551 = vmatpush1.msra.mxu0 %v550
        %552 = vmatprep.subr.mxu0 0.0
        %v553 = vand.u32 %v172, 4294901760
        %554 = vmatpush1.msra.mxu0 %v553
        %555 = vmatprep.subr.mxu0 0.0
        %v556 = vand.u32 %v173, 4294901760
        %557 = vmatpush1.msra.mxu0 %v556
        %558 = vmatprep.subr.mxu0 0.0
        %v559 = vand.u32 %v174, 4294901760
        %560 = vmatpush1.msra.mxu0 %v559
        %561 = vmatprep.subr.mxu0 0.0
        %v562 = vand.u32 %v175, 4294901760
        %563 = vmatpush1.msra.mxu0 %v562
        %564 = vmatprep.subr.mxu0 0.0
        %v565 = vand.u32 %v176, 4294901760
        %566 = vmatpush1.msra.mxu0 %v565
        %567 = vmatprep.subr.mxu0 0.0
        %v568 = vand.u32 %v177, 4294901760
        %569 = vmatpush1.msra.mxu0 %v568
        %570 = vmatprep.subr.mxu0 0.0
        %v571 = vand.u32 %v178, 4294901760
        %572 = vmatpush1.msra.mxu0 %v571
        %573 = vmatprep.subr.mxu0 0.0
        %574 = vmatpush1.msra.mxu0 0.0
        %575 = vmatprep.subr.mxu0 0.0
        %576 = vmatpush1.msra.mxu0 0.0
        %577 = vmatprep.subr.mxu0 0.0
        %578 = vmatpush1.msra.mxu0 0.0
        %579 = vmatprep.subr.mxu0 0.0
        %580 = vmatpush1.msra.mxu0 0.0
        %581 = vmatprep.subr.mxu0 0.0
        %582 = vmatpush1.msra.mxu0 0.0
        %583 = vmatprep.subr.mxu0 0.0
        %584 = vmatpush1.msra.mxu0 0.0
        %585 = vmatprep.subr.mxu0 0.0
        %586 = vmatpush1.msra.mxu0 0.0
        %587 = vmatprep.subr.mxu0 0.0
        %588 = vmatpush1.msra.mxu0 0.0
        %589 = vmatprep.subr.mxu0 0.0
        %590 = vmatpush1.msra.mxu0 0.0
        %591 = vmatprep.subr.mxu0 0.0
        %592 = vmatpush1.msra.mxu0 0.0
        %593 = vmatprep.subr.mxu0 0.0
        %594 = vmatpush1.msra.mxu0 0.0
        %595 = vmatprep.subr.mxu0 0.0
        %596 = vmatpush1.msra.mxu0 0.0
        %597 = vmatprep.subr.mxu0 0.0
        %598 = vmatpush1.msra.mxu0 0.0
        %599 = vmatprep.subr.mxu0 0.0
        %600 = vmatpush1.msra.mxu0 0.0
        %601 = vmatprep.subr.mxu0 0.0
        %602 = vmatpush1.msra.mxu0 0.0
        %603 = vmatprep.subr.mxu0 0.0
        %604 = vmatpush1.msra.mxu0 0.0
        %605 = vmatprep.mubr.f32.mxu0 0.0
        %v606 = vand.u32 %v162, 4294901760
        %v607 = vsub.f32 %v162, %v606
        %v608 = vand.u32 %v607, 4294901760
        %609 = vmatmul.mubr.f32.gmra.mrb[0].mxu0 %v608
        %v610 = vpop.f32.mrb[0].mxu0
        %v611 = vadd.f32 %v522, %v610
        %v612 = vpop.f32.mrb[0].mxu0
        %613 = vdwg.mxu0
        %614 = vmatprep.subr.mxu0 0.0
        %v615 = vand.u32 %v163, 4294901760
        %v616 = vsub.f32 %v163, %v615
        %v617 = vand.u32 %v616, 4294901760
        %618 = vmatpush1.msra.mxu0 %v617
        %619 = vmatprep.subr.mxu0 0.0
        %v620 = vand.u32 %v164, 4294901760
        %v621 = vsub.f32 %v164, %v620
        %v622 = vand.u32 %v621, 4294901760
        %623 = vmatpush1.msra.mxu0 %v622
        %624 = vmatprep.subr.mxu0 0.0
        %v625 = vand.u32 %v165, 4294901760
        %v626 = vsub.f32 %v165, %v625
        %v627 = vand.u32 %v626, 4294901760
        %628 = vmatpush1.msra.mxu0 %v627
        %629 = vmatprep.subr.mxu0 0.0
        %v630 = vand.u32 %v166, 4294901760
        %v631 = vsub.f32 %v166, %v630
        %v632 = vand.u32 %v631, 4294901760
        %633 = vmatpush1.msra.mxu0 %v632
        %634 = vmatprep.subr.mxu0 0.0
        %v635 = vand.u32 %v167, 4294901760
        %v636 = vsub.f32 %v167, %v635
        %v637 = vand.u32 %v636, 4294901760
        %638 = vmatpush1.msra.mxu0 %v637
        %639 = vmatprep.subr.mxu0 0.0
        %v640 = vand.u32 %v168, 4294901760
        %v641 = vsub.f32 %v168, %v640
        %v642 = vand.u32 %v641, 4294901760
        %643 = vmatpush1.msra.mxu0 %v642
        %644 = vmatprep.subr.mxu0 0.0
        %v645 = vand.u32 %v169, 4294901760
        %v646 = vsub.f32 %v169, %v645
        %v647 = vand.u32 %v646, 4294901760
        %648 = vmatpush1.msra.mxu0 %v647
        %649 = vmatprep.subr.mxu0 0.0
        %v650 = vand.u32 %v170, 4294901760
        %v651 = vsub.f32 %v170, %v650
        %v652 = vand.u32 %v651, 4294901760
        %653 = vmatpush1.msra.mxu0 %v652
        %654 = vmatprep.subr.mxu0 0.0
        %v655 = vand.u32 %v171, 4294901760
        %v656 = vsub.f32 %v171, %v655
        %v657 = vand.u32 %v656, 4294901760
        %658 = vmatpush1.msra.mxu0 %v657
        %659 = vmatprep.subr.mxu0 0.0
        %v660 = vand.u32 %v172, 4294901760
        %v661 = vsub.f32 %v172, %v660
        %v662 = vand.u32 %v661, 4294901760
        %663 = vmatpush1.msra.mxu0 %v662
        %664 = vmatprep.subr.mxu0 0.0
        %v665 = vand.u32 %v173, 4294901760
        %v666 = vsub.f32 %v173, %v665
        %v667 = vand.u32 %v666, 4294901760
        %668 = vmatpush1.msra.mxu0 %v667
        %669 = vmatprep.subr.mxu0 0.0
        %v670 = vand.u32 %v174, 4294901760
        %v671 = vsub.f32 %v174, %v670
        %v672 = vand.u32 %v671, 4294901760
        %673 = vmatpush1.msra.mxu0 %v672
        %674 = vmatprep.subr.mxu0 0.0
        %v675 = vand.u32 %v175, 4294901760
        %v676 = vsub.f32 %v175, %v675
        %v677 = vand.u32 %v676, 4294901760
        %678 = vmatpush1.msra.mxu0 %v677
        %679 = vmatprep.subr.mxu0 0.0
        %v680 = vand.u32 %v176, 4294901760
        %v681 = vsub.f32 %v176, %v680
        %v682 = vand.u32 %v681, 4294901760
        %683 = vmatpush1.msra.mxu0 %v682
        %684 = vmatprep.subr.mxu0 0.0
        %v685 = vand.u32 %v177, 4294901760
        %v686 = vsub.f32 %v177, %v685
        %v687 = vand.u32 %v686, 4294901760
        %688 = vmatpush1.msra.mxu0 %v687
        %689 = vmatprep.subr.mxu0 0.0
        %v690 = vand.u32 %v178, 4294901760
        %v691 = vsub.f32 %v178, %v690
        %v692 = vand.u32 %v691, 4294901760
        %693 = vmatpush1.msra.mxu0 %v692
        %694 = vmatprep.subr.mxu0 0.0
        %695 = vmatpush1.msra.mxu0 0.0
        %696 = vmatprep.subr.mxu0 0.0
        %697 = vmatpush1.msra.mxu0 0.0
        %698 = vmatprep.subr.mxu0 0.0
        %699 = vmatpush1.msra.mxu0 0.0
        %700 = vmatprep.subr.mxu0 0.0
        %701 = vmatpush1.msra.mxu0 0.0
        %702 = vmatprep.subr.mxu0 0.0
        %703 = vmatpush1.msra.mxu0 0.0
        %704 = vmatprep.subr.mxu0 0.0
        %705 = vmatpush1.msra.mxu0 0.0
        %706 = vmatprep.subr.mxu0 0.0
        %707 = vmatpush1.msra.mxu0 0.0
        %708 = vmatprep.subr.mxu0 0.0
        %709 = vmatpush1.msra.mxu0 0.0
        %710 = vmatprep.subr.mxu0 0.0
        %711 = vmatpush1.msra.mxu0 0.0
        %712 = vmatprep.subr.mxu0 0.0
        %713 = vmatpush1.msra.mxu0 0.0
        %714 = vmatprep.subr.mxu0 0.0
        %715 = vmatpush1.msra.mxu0 0.0
        %716 = vmatprep.subr.mxu0 0.0
        %717 = vmatpush1.msra.mxu0 0.0
        %718 = vmatprep.subr.mxu0 0.0
        %719 = vmatpush1.msra.mxu0 0.0
        %720 = vmatprep.subr.mxu0 0.0
        %721 = vmatpush1.msra.mxu0 0.0
        %722 = vmatprep.subr.mxu0 0.0
        %723 = vmatpush1.msra.mxu0 0.0
        %724 = vmatprep.subr.mxu0 0.0
        %725 = vmatpush1.msra.mxu0 0.0
        %726 = vmatprep.mubr.f32.mxu0 0.0
        %v727 = vand.u32 %v162, 4294901760
        %728 = vmatmul.mubr.f32.gmra.mrb[0].mxu0 %v727
        %v729 = vpop.f32.mrb[0].mxu0
        %v730 = vadd.f32 %v611, %v729
        %v731 = vpop.f32.mrb[0].mxu0
        %732 = vdwg.mxu0
        %733 = vmatprep.subr.mxu0 0.0
        %v734 = vand.u32 %v163, 4294901760
        %735 = vmatpush1.msra.mxu0 %v734
        %736 = vmatprep.subr.mxu0 0.0
        %v737 = vand.u32 %v164, 4294901760
        %738 = vmatpush1.msra.mxu0 %v737
        %739 = vmatprep.subr.mxu0 0.0
        %v740 = vand.u32 %v165, 4294901760
        %741 = vmatpush1.msra.mxu0 %v740
        %742 = vmatprep.subr.mxu0 0.0
        %v743 = vand.u32 %v166, 4294901760
        %744 = vmatpush1.msra.mxu0 %v743
        %745 = vmatprep.subr.mxu0 0.0
        %v746 = vand.u32 %v167, 4294901760
        %747 = vmatpush1.msra.mxu0 %v746
        %748 = vmatprep.subr.mxu0 0.0
        %v749 = vand.u32 %v168, 4294901760
        %750 = vmatpush1.msra.mxu0 %v749
        %751 = vmatprep.subr.mxu0 0.0
        %v752 = vand.u32 %v169, 4294901760
        %753 = vmatpush1.msra.mxu0 %v752
        %754 = vmatprep.subr.mxu0 0.0
        %v755 = vand.u32 %v170, 4294901760
        %756 = vmatpush1.msra.mxu0 %v755
        %757 = vmatprep.subr.mxu0 0.0
        %v758 = vand.u32 %v171, 4294901760
        %759 = vmatpush1.msra.mxu0 %v758
        %760 = vmatprep.subr.mxu0 0.0
        %v761 = vand.u32 %v172, 4294901760
        %762 = vmatpush1.msra.mxu0 %v761
        %763 = vmatprep.subr.mxu0 0.0
        %v764 = vand.u32 %v173, 4294901760
        %765 = vmatpush1.msra.mxu0 %v764
        %766 = vmatprep.subr.mxu0 0.0
        %v767 = vand.u32 %v174, 4294901760
        %768 = vmatpush1.msra.mxu0 %v767
        %769 = vmatprep.subr.mxu0 0.0
        %v770 = vand.u32 %v175, 4294901760
        %771 = vmatpush1.msra.mxu0 %v770
        %772 = vmatprep.subr.mxu0 0.0
        %v773 = vand.u32 %v176, 4294901760
        %774 = vmatpush1.msra.mxu0 %v773
        %775 = vmatprep.subr.mxu0 0.0
        %v776 = vand.u32 %v177, 4294901760
        %777 = vmatpush1.msra.mxu0 %v776
        %778 = vmatprep.subr.mxu0 0.0
        %v779 = vand.u32 %v178, 4294901760
        %780 = vmatpush1.msra.mxu0 %v779
        %781 = vmatprep.subr.mxu0 0.0
        %782 = vmatpush1.msra.mxu0 0.0
        %783 = vmatprep.subr.mxu0 0.0
        %784 = vmatpush1.msra.mxu0 0.0
        %785 = vmatprep.subr.mxu0 0.0
        %786 = vmatpush1.msra.mxu0 0.0
        %787 = vmatprep.subr.mxu0 0.0
        %788 = vmatpush1.msra.mxu0 0.0
        %789 = vmatprep.subr.mxu0 0.0
        %790 = vmatpush1.msra.mxu0 0.0
        %791 = vmatprep.subr.mxu0 0.0
        %792 = vmatpush1.msra.mxu0 0.0
        %793 = vmatprep.subr.mxu0 0.0
        %794 = vmatpush1.msra.mxu0 0.0
        %795 = vmatprep.subr.mxu0 0.0
        %796 = vmatpush1.msra.mxu0 0.0
        %797 = vmatprep.subr.mxu0 0.0
        %798 = vmatpush1.msra.mxu0 0.0
        %799 = vmatprep.subr.mxu0 0.0
        %800 = vmatpush1.msra.mxu0 0.0
        %801 = vmatprep.subr.mxu0 0.0
        %802 = vmatpush1.msra.mxu0 0.0
        %803 = vmatprep.subr.mxu0 0.0
        %804 = vmatpush1.msra.mxu0 0.0
        %805 = vmatprep.subr.mxu0 0.0
        %806 = vmatpush1.msra.mxu0 0.0
        %807 = vmatprep.subr.mxu0 0.0
        %808 = vmatpush1.msra.mxu0 0.0
        %809 = vmatprep.subr.mxu0 0.0
        %810 = vmatpush1.msra.mxu0 0.0
        %811 = vmatprep.subr.mxu0 0.0
        %812 = vmatpush1.msra.mxu0 0.0
        %813 = vmatprep.mubr.f32.mxu0 0.0
        %v814 = vand.u32 %v162, 4294901760
        %815 = vmatmul.mubr.f32.gmra.mrb[0].mxu0 %v814
        %v816 = vpop.f32.mrb[0].mxu0
        %v817 = vadd.f32 %v730, %v816
        %v818 = vpop.f32.mrb[0].mxu0
        %819 = vdwg.mxu0
        %vm820 = vcmask 261120
        %821 = vst.msk [vmem:[%s134] sm:$0xff] %vm820, %v817
        %s822 = sand.u32 %s71, 1
        %s823 = scalar_lea.sflag [#allocation3], %s822
        %s824 = sand.u32 %s71, 1
        %s825 = smul.addr %s824, 8
        %s826 = scalar_lea.vmem [#allocation2], %s825
        // Predicated region
        $region29: #{tpu_custom_call.1} parent=27 // pred_check
          %p827 = pneg %p81
        $region30: #{tpu_custom_call.1} parent=27 // pred_check_branch
          %829 = sbr.rel (%p827) target = $region32
        $region31: #{tpu_custom_call.1} parent=27 // pred_region
          %s831 = ssub.s32 128, 128
          %832 = vsyncadd %s823, %s831
          %s833 = smul.addr %s16, 128
          %s834 = scalar_lea.hbm %s2, %s833
          %s836 = sshll.u32 %s826, 4
          %s837 = int_to_ptr.vmem [resolvable:$true] %s836
          %839 = dma.vmem_to_hbm [thread:$0]  %s837, 128, %s834, %s823
        $region32: #{tpu_custom_call.1} parent=27 // pred_fallthru
          _
      $region28: #{tpu_custom_call.1} parent=5 // pred_fallthru
        _
      %p840 = scmp.le.s32.totalorder 2, %s11
      // Predicated region
      $region33: #{tpu_custom_call.1} parent=5 // pred_check
        %p841 = pneg %p840
      $region34: #{tpu_custom_call.1} parent=5 // pred_check_branch
        %843 = sbr.rel (%p841) target = $region36
      $region35: #{tpu_custom_call.1} parent=5 // pred_region
        %s844 = ssub.s32 %s11, 2
        // Predicated region
        $region37: #{tpu_custom_call.1} parent=35 // pred_check
          %p845 = pneg %p87
        $region38: #{tpu_custom_call.1} parent=35 // pred_check_branch
          %847 = sbr.rel (%p845) target = $region40
        $region39: #{tpu_custom_call.1} parent=35 // pred_region
          %s848 = sand.u32 %s72, 1
          %s849 = scalar_lea.sflag [#allocation3], %s848
          %s850 = sand.u32 %s72, 1
          %s851 = smul.addr %s850, 8
          %s852 = scalar_lea.vmem [#allocation2], %s851
          %853 = dma.done %s849, 128
        $region40: #{tpu_custom_call.1} parent=35 // pred_fallthru
          _
      $region36: #{tpu_custom_call.1} parent=5 // pred_fallthru
        _
    $region6: #{tpu_custom_call.1} parent=1 // loop_footer
      %s15 = sadd.s32 1, %s11
    $region7: #{tpu_custom_call.1} parent=1 // loop_footer_branch
      %10 = sbr.rel target = $region3
    $region8: #{tpu_custom_call.1} parent=1 // loop_exit
      _
    %854 = vsyncpa [#allocation3], 1
    %s855 = scalar_lea.sflag [#allocation3], 1
    %856 = vsyncpa %s855, 1

</llo_original>
